<compile_context>
chip_gen: v7x
topology: tpu7x:2x2x1
jax: 0.10.0
libtpu: 0.0.40
codegen_flags: <defaults>
</compile_context>

<pallas_src>
import functools
import math

import jax
import jax.numpy as jnp
from jax import lax
from jax.experimental import pallas as pl
from jax.experimental.pallas import tpu as pltpu

_LANES = 128
_MAX_TILE_ROWS = 1024  # 1024*128*4B = 512 KiB per f32 input block


def _round_up(x, m):
    return ((x + m - 1) // m) * m


def _bce_dice_kernel(pred_ref, tgt_ref, out_ref,
                     bce_acc, inter_acc, pt_acc,
                     *, rows, tile_rows, num_tiles, binary_target):
    ji = pl.program_id(1)
    last = num_tiles - 1

    @pl.when(ji == 0)
    def _init():
        bce_acc[...] = jnp.zeros_like(bce_acc)
        inter_acc[...] = jnp.zeros_like(inter_acc)
        pt_acc[...] = jnp.zeros_like(pt_acc)

    def fold(x):
        # (tile_rows,128) -> (tile_rows//8, 8, 128) -> sum over leading axis:
        # pure vreg adds on the VALU, no cross-lane (XLU) work per step.
        return jnp.sum(x.reshape(tile_rows // 8, 8, _LANES), axis=0)

    def accumulate(p, t, mask=None):
        p = p.astype(jnp.float32)
        t = t.astype(jnp.float32)
        if mask is not None:
            # Masked-out / padded elements become p = t = 0 which contribute
            # exactly 0 to every accumulator (log clamp makes 0*log(0) -> 0).
            p = jnp.where(mask, p, 0.0)
            t = jnp.where(mask, t, 0.0)
        if binary_target:
            # Hard {0,1} targets: one log instead of two (EUP relief).
            bce = -jnp.maximum(jnp.log(jnp.where(t > 0.5, p, 1.0 - p)), -100.0)
        else:
            log_p = jnp.maximum(jnp.log(p), -100.0)
            log_1mp = jnp.maximum(jnp.log(1.0 - p), -100.0)
            bce = -(t * (log_p - log_1mp) + log_1mp)
        bce_acc[...] = bce_acc[...] + fold(bce)
        inter_acc[...] = inter_acc[...] + fold(p * t)
        pt_acc[...] = pt_acc[...] + fold(p + t)

    p_tile = pred_ref[0]   # (tile_rows, 128)
    t_tile = tgt_ref[0]    # (tile_rows, 128)

    if rows % tile_rows == 0:
        # No ragged tile: no masking code is emitted at all.
        accumulate(p_tile, t_tile)
    else:
        @pl.when(ji != last)
        def _full_tile():
            accumulate(p_tile, t_tile)

        @pl.when(ji == last)
        def _ragged_tile():
            valid = rows - last * tile_rows          # static Python int
            row_idx = lax.broadcasted_iota(jnp.int32, (tile_rows, _LANES), 0)
            accumulate(p_tile, t_tile, mask=row_idx < valid)

    @pl.when(ji == last)
    def _finalize():
        smooth = 1.0
        bce_sum = jnp.sum(bce_acc[...])
        inter = jnp.sum(inter_acc[...])
        pt = jnp.sum(pt_acc[...])
        dice_score = (2.0 * inter + smooth) / (pt + smooth)
        sub = lax.broadcasted_iota(jnp.int32, (8, _LANES), 0)
        lane = lax.broadcasted_iota(jnp.int32, (8, _LANES), 1)
        out_ref[0] = jnp.where(
            (sub == 0) & (lane == 0), bce_sum,
            jnp.where((sub == 0) & (lane == 1), dice_score, 0.0))


def bce_dice_loss(pred, target, wb=1.0, wd=1.0, binary_target=False):
    """pred, target: NCHW arrays; pred in (0,1) (e.g. sigmoid outputs)."""
    assert pred.shape == target.shape
    b = pred.shape[0]
    n = int(math.prod(pred.shape[1:]))

    pred2 = pred.reshape(b, n)
    tgt2 = target.reshape(b, n)

    rows = -(-n // _LANES)           # 128-lane rows per batch element
    n_pad = rows * _LANES
    if n_pad != n:
        # Rare path (n % 128 != 0): pad to the next lane multiple only.
        pad = ((0, 0), (0, n_pad - n))
        pred2 = jnp.pad(pred2, pad)
        tgt2 = jnp.pad(tgt2, pad)

    pred3 = pred2.reshape(b, rows, _LANES)   # free reshape, no copy
    tgt3 = tgt2.reshape(b, rows, _LANES)

    # Biggest tile that fits; never collapses to tiny blocks for awkward rows.
    if rows % 8 == 0:
        tile_rows = min(_MAX_TILE_ROWS, rows)
    else:
        tile_rows = min(_MAX_TILE_ROWS, _round_up(rows, 8))
    num_tiles = -(-rows // tile_rows)

    kernel = functools.partial(
        _bce_dice_kernel, rows=rows, tile_rows=tile_rows,
        num_tiles=num_tiles, binary_target=bool(binary_target))

    partials = pl.pallas_call(
        kernel,
        out_shape=jax.ShapeDtypeStruct((b, 8, _LANES), jnp.float32),
        grid_spec=pltpu.PrefetchScalarGridSpec(
            num_scalar_prefetch=0,
            grid=(b, num_tiles),
            in_specs=[
                pl.BlockSpec((1, tile_rows, _LANES), lambda bi, ji: (bi, ji, 0)),
                pl.BlockSpec((1, tile_rows, _LANES), lambda bi, ji: (bi, ji, 0)),
            ],
            out_specs=pl.BlockSpec((1, 8, _LANES), lambda bi, ji: (bi, 0, 0)),
            scratch_shapes=[
                pltpu.VMEM((8, _LANES), jnp.float32),  # per-batch BCE partials
                pltpu.VMEM((8, _LANES), jnp.float32),  # per-batch p*t partials
                pltpu.VMEM((8, _LANES), jnp.float32),  # per-batch (p+t) partials
            ],
        ),
        compiler_params=pltpu.CompilerParams(
            dimension_semantics=("parallel", "arbitrary"),
        ),
    )(pred3, tgt3)

    # Tiny final combine over b per-batch partials (plain XLA ops).
    bce = jnp.sum(partials[:, 0, 0]) / (float(b) * float(n))
    dice = 1.0 - jnp.sum(partials[:, 0, 1]) / float(b)
    return wd * dice + wb * bce


def _reference(pred, target, wb=1.0, wd=1.0):
    b = pred.shape[0]
    p = pred.reshape(b, -1).astype(jnp.float32)
    t = target.reshape(b, -1).astype(jnp.float32)
    log_p = jnp.maximum(jnp.log(p), -100.0)
    log_1mp = jnp.maximum(jnp.log(1.0 - p), -100.0)
    bce = jnp.mean(-(t * log_p + (1.0 - t) * log_1mp))
    smooth = 1.0
    inter = jnp.sum(p * t, axis=1)
    dice_score = (2.0 * inter + smooth) / (jnp.sum(p, axis=1) + jnp.sum(t, axis=1) + smooth)
    dice = 1.0 - jnp.sum(dice_score) / b
    return wd * dice + wb * bce


if __name__ == "__main__":
    key = jax.random.PRNGKey(0)
    k1, k2 = jax.random.split(key)
    B, C, H, W = 2, 4, 16, 16
    # pred must be in (0,1) — emulate sigmoid outputs; target is a binary mask.
    pred = jax.nn.sigmoid(jax.random.normal(k1, (B, C, H, W), dtype=jnp.float32))
    target = (jax.random.uniform(k2, (B, C, H, W), dtype=jnp.float32) > 0.5).astype(jnp.float32)

    loss = jax.block_until_ready(bce_dice_loss(pred, target, wb=1.0, wd=1.0))
    ref = jax.block_until_ready(_reference(pred, target, wb=1.0, wd=1.0))

    assert jnp.allclose(loss, ref, rtol=1e-5, atol=1e-5), (loss, ref)
    print("KERNEL_OK")
</pallas_src>

<mosaic_0001>
module attributes {stable_mosaic.version = 11 : i64} {
  func.func @_bce_dice_kernel(%arg0: i32, %arg1: i32, %arg2: memref<1x8x128xf32, #tpu.memory_space<vmem>>, %arg3: memref<1x8x128xf32, #tpu.memory_space<vmem>>, %arg4: memref<1x8x128xf32, #tpu.memory_space<vmem>>, %arg5: memref<8x128xf32, #tpu.memory_space<vmem>>, %arg6: memref<8x128xf32, #tpu.memory_space<vmem>>, %arg7: memref<8x128xf32, #tpu.memory_space<vmem>>) attributes {dimension_semantics = [#tpu.dimension_semantics<parallel>, #tpu.dimension_semantics<arbitrary>], iteration_bounds = array<i64: 2, 1>, scalar_prefetch = 0 : i64, scratch_operands = 3 : i64, tpu.core_type = #tpu.core_type<tc>, window_params = [{transform_indices = @transform_0, window_bounds = array<i64: 1, 8, 128>}, {transform_indices = @transform_1, window_bounds = array<i64: 1, 8, 128>}, {transform_indices = @transform_2, window_bounds = array<i64: 1, 8, 128>}]} {
    %c0_i32 = arith.constant 0 : i32
    %0 = arith.cmpi eq, %arg1, %c0_i32 : i32
    %1 = arith.extui %0 : i1 to i32
    %c0_i32_0 = arith.constant 0 : i32
    %2 = arith.cmpi ne, %1, %c0_i32_0 : i32
    scf.if %2 {
      %cst_26 = arith.constant 0.000000e+00 : f32
      %40 = vector.broadcast %cst_26 : f32 to vector<8x128xf32>
      %c0_27 = arith.constant 0 : index
      %c0_28 = arith.constant 0 : index
      %41 = vector.load %arg5[%c0_27, %c0_28] : memref<8x128xf32, #tpu.memory_space<vmem>>, vector<8x128xf32>
      tpu.vector_store %arg5[%c0_27, %c0_28], %40 {strides = array<i32>} : memref<8x128xf32, #tpu.memory_space<vmem>>, vector<8x128xf32>,
      %cst_29 = arith.constant 0.000000e+00 : f32
      %42 = vector.broadcast %cst_29 : f32 to vector<8x128xf32>
      %c0_30 = arith.constant 0 : index
      %c0_31 = arith.constant 0 : index
      %43 = vector.load %arg6[%c0_30, %c0_31] : memref<8x128xf32, #tpu.memory_space<vmem>>, vector<8x128xf32>
      tpu.vector_store %arg6[%c0_30, %c0_31], %42 {strides = array<i32>} : memref<8x128xf32, #tpu.memory_space<vmem>>, vector<8x128xf32>,
      %cst_32 = arith.constant 0.000000e+00 : f32
      %44 = vector.broadcast %cst_32 : f32 to vector<8x128xf32>
      %c0_33 = arith.constant 0 : index
      %c0_34 = arith.constant 0 : index
      %45 = vector.load %arg7[%c0_33, %c0_34] : memref<8x128xf32, #tpu.memory_space<vmem>>, vector<8x128xf32>
      tpu.vector_store %arg7[%c0_33, %c0_34], %44 {strides = array<i32>} : memref<8x128xf32, #tpu.memory_space<vmem>>, vector<8x128xf32>,
    } else {
    }
    %c0 = arith.constant 0 : index
    %c0_1 = arith.constant 0 : index
    %c0_2 = arith.constant 0 : index
    %3 = vector.load %arg2[%c0, %c0_1, %c0_2] : memref<1x8x128xf32, #tpu.memory_space<vmem>>, vector<1x8x128xf32>
    %4 = vector.shape_cast %3 : vector<1x8x128xf32> to vector<8x128xf32>
    %c0_3 = arith.constant 0 : index
    %c0_4 = arith.constant 0 : index
    %c0_5 = arith.constant 0 : index
    %5 = vector.load %arg3[%c0_3, %c0_4, %c0_5] : memref<1x8x128xf32, #tpu.memory_space<vmem>>, vector<1x8x128xf32>
    %6 = vector.shape_cast %5 : vector<1x8x128xf32> to vector<8x128xf32>
    %7 = math.log %4 : vector<8x128xf32>
    %cst = arith.constant -1.000000e+02 : f32
    %8 = vector.broadcast %cst : f32 to vector<8x128xf32>
    %9 = arith.maximumf %7, %8 : vector<8x128xf32>
    %cst_6 = arith.constant 1.000000e+00 : f32
    %10 = vector.broadcast %cst_6 : f32 to vector<8x128xf32>
    %11 = arith.subf %10, %4 : vector<8x128xf32>
    %12 = math.log %11 : vector<8x128xf32>
    %cst_7 = arith.constant -1.000000e+02 : f32
    %13 = vector.broadcast %cst_7 : f32 to vector<8x128xf32>
    %14 = arith.maximumf %12, %13 : vector<8x128xf32>
    %15 = arith.subf %9, %14 : vector<8x128xf32>
    %16 = arith.mulf %6, %15 : vector<8x128xf32>
    %17 = arith.addf %16, %14 : vector<8x128xf32>
    %cst_8 = arith.constant 0.000000e+00 : f32
    %18 = vector.broadcast %cst_8 : f32 to vector<8x128xf32>
    %19 = arith.subf %18, %17 : vector<8x128xf32>
    %c0_9 = arith.constant 0 : index
    %c0_10 = arith.constant 0 : index
    %20 = vector.load %arg5[%c0_9, %c0_10] : memref<8x128xf32, #tpu.memory_space<vmem>>, vector<8x128xf32>
    %21 = vector.shape_cast %19 : vector<8x128xf32> to vector<1x8x128xf32>
    %cst_11 = arith.constant dense<0.000000e+00> : vector<8x128xf32>
    %22 = vector.multi_reduction <add>, %21, %cst_11 [0] : vector<1x8x128xf32> to vector<8x128xf32>
    %23 = arith.addf %20, %22 : vector<8x128xf32>
    %c0_12 = arith.constant 0 : index
    %c0_13 = arith.constant 0 : index
    %24 = vector.load %arg5[%c0_12, %c0_13] : memref<8x128xf32, #tpu.memory_space<vmem>>, vector<8x128xf32>
    tpu.vector_store %arg5[%c0_12, %c0_13], %23 {strides = array<i32>} : memref<8x128xf32, #tpu.memory_space<vmem>>, vector<8x128xf32>,
    %c0_14 = arith.constant 0 : index
    %c0_15 = arith.constant 0 : index
    %25 = vector.load %arg6[%c0_14, %c0_15] : memref<8x128xf32, #tpu.memory_space<vmem>>, vector<8x128xf32>
    %26 = arith.mulf %4, %6 : vector<8x128xf32>
    %27 = vector.shape_cast %26 : vector<8x128xf32> to vector<1x8x128xf32>
    %cst_16 = arith.constant dense<0.000000e+00> : vector<8x128xf32>
    %28 = vector.multi_reduction <add>, %27, %cst_16 [0] : vector<1x8x128xf32> to vector<8x128xf32>
    %29 = arith.addf %25, %28 : vector<8x128xf32>
    %c0_17 = arith.constant 0 : index
    %c0_18 = arith.constant 0 : index
    %30 = vector.load %arg6[%c0_17, %c0_18] : memref<8x128xf32, #tpu.memory_space<vmem>>, vector<8x128xf32>
    tpu.vector_store %arg6[%c0_17, %c0_18], %29 {strides = array<i32>} : memref<8x128xf32, #tpu.memory_space<vmem>>, vector<8x128xf32>,
    %c0_19 = arith.constant 0 : index
    %c0_20 = arith.constant 0 : index
    %31 = vector.load %arg7[%c0_19, %c0_20] : memref<8x128xf32, #tpu.memory_space<vmem>>, vector<8x128xf32>
    %32 = arith.addf %4, %6 : vector<8x128xf32>
    %33 = vector.shape_cast %32 : vector<8x128xf32> to vector<1x8x128xf32>
    %cst_21 = arith.constant dense<0.000000e+00> : vector<8x128xf32>
    %34 = vector.multi_reduction <add>, %33, %cst_21 [0] : vector<1x8x128xf32> to vector<8x128xf32>
    %35 = arith.addf %31, %34 : vector<8x128xf32>
    %c0_22 = arith.constant 0 : index
    %c0_23 = arith.constant 0 : index
    %36 = vector.load %arg7[%c0_22, %c0_23] : memref<8x128xf32, #tpu.memory_space<vmem>>, vector<8x128xf32>
    tpu.vector_store %arg7[%c0_22, %c0_23], %35 {strides = array<i32>} : memref<8x128xf32, #tpu.memory_space<vmem>>, vector<8x128xf32>,
    %c0_i32_24 = arith.constant 0 : i32
    %37 = arith.cmpi eq, %arg1, %c0_i32_24 : i32
    %38 = arith.extui %37 : i1 to i32
    %c0_i32_25 = arith.constant 0 : i32
    %39 = arith.cmpi ne, %38, %c0_i32_25 : i32
    scf.if %39 {
      %c0_26 = arith.constant 0 : index
      %c0_27 = arith.constant 0 : index
      %40 = vector.load %arg5[%c0_26, %c0_27] : memref<8x128xf32, #tpu.memory_space<vmem>>, vector<8x128xf32>
      %41 = vector.shape_cast %40 : vector<8x128xf32> to vector<1x8x128xf32>
      %cst_28 = arith.constant dense<0.000000e+00> : vector<1xf32>
      %42 = vector.multi_reduction <add>, %41, %cst_28 [1, 2] : vector<1x8x128xf32> to vector<1xf32>
      %43 = vector.shape_cast %42 : vector<1xf32> to vector<1x1x1xf32>
      %44 = vector.extract %43[0, 0, 0] : f32 from vector<1x1x1xf32>
      %c0_29 = arith.constant 0 : index
      %c0_30 = arith.constant 0 : index
      %45 = vector.load %arg6[%c0_29, %c0_30] : memref<8x128xf32, #tpu.memory_space<vmem>>, vector<8x128xf32>
      %46 = vector.shape_cast %45 : vector<8x128xf32> to vector<1x8x128xf32>
      %cst_31 = arith.constant dense<0.000000e+00> : vector<1xf32>
      %47 = vector.multi_reduction <add>, %46, %cst_31 [1, 2] : vector<1x8x128xf32> to vector<1xf32>
      %48 = vector.shape_cast %47 : vector<1xf32> to vector<1x1x1xf32>
      %49 = vector.extract %48[0, 0, 0] : f32 from vector<1x1x1xf32>
      %c0_32 = arith.constant 0 : index
      %c0_33 = arith.constant 0 : index
      %50 = vector.load %arg7[%c0_32, %c0_33] : memref<8x128xf32, #tpu.memory_space<vmem>>, vector<8x128xf32>
      %51 = vector.shape_cast %50 : vector<8x128xf32> to vector<1x8x128xf32>
      %cst_34 = arith.constant dense<0.000000e+00> : vector<1xf32>
      %52 = vector.multi_reduction <add>, %51, %cst_34 [1, 2] : vector<1x8x128xf32> to vector<1xf32>
      %53 = vector.shape_cast %52 : vector<1xf32> to vector<1x1x1xf32>
      %54 = vector.extract %53[0, 0, 0] : f32 from vector<1x1x1xf32>
      %cst_35 = arith.constant 2.000000e+00 : f32
      %55 = arith.mulf %cst_35, %49 : f32
      %cst_36 = arith.constant 1.000000e+00 : f32
      %56 = arith.addf %55, %cst_36 : f32
      %cst_37 = arith.constant 1.000000e+00 : f32
      %57 = arith.addf %54, %cst_37 : f32
      %58 = arith.divf %56, %57 : f32
      %59 = tpu.iota {dimensions = array<i32: 0>} : vector<8x128xi32>
      %60 = tpu.iota {dimensions = array<i32: 1>} : vector<8x128xi32>
      %c0_i32_38 = arith.constant 0 : i32
      %61 = vector.broadcast %c0_i32_38 : i32 to vector<8x128xi32>
      %62 = arith.cmpi eq, %59, %61 : vector<8x128xi32>
      %c0_i32_39 = arith.constant 0 : i32
      %63 = vector.broadcast %c0_i32_39 : i32 to vector<8x128xi32>
      %64 = arith.cmpi eq, %60, %63 : vector<8x128xi32>
      %65 = arith.andi %62, %64 : vector<8x128xi1>
      %c0_i32_40 = arith.constant 0 : i32
      %66 = vector.broadcast %c0_i32_40 : i32 to vector<8x128xi32>
      %67 = arith.cmpi eq, %59, %66 : vector<8x128xi32>
      %c1_i32 = arith.constant 1 : i32
      %68 = vector.broadcast %c1_i32 : i32 to vector<8x128xi32>
      %69 = arith.cmpi eq, %60, %68 : vector<8x128xi32>
      %70 = arith.andi %67, %69 : vector<8x128xi1>
      %cst_41 = arith.constant 0.000000e+00 : f32
      %71 = vector.broadcast %58 : f32 to vector<8x128xf32>
      %72 = vector.broadcast %cst_41 : f32 to vector<8x128xf32>
      %73 = arith.select %70, %71, %72 : vector<8x128xi1>, vector<8x128xf32>
      %74 = vector.broadcast %44 : f32 to vector<8x128xf32>
      %75 = arith.select %65, %74, %73 : vector<8x128xi1>, vector<8x128xf32>
      %c0_42 = arith.constant 0 : index
      %c0_43 = arith.constant 0 : index
      %c0_44 = arith.constant 0 : index
      %76 = vector.load %arg4[%c0_42, %c0_43, %c0_44] : memref<1x8x128xf32, #tpu.memory_space<vmem>>, vector<1x8x128xf32>
      %77 = vector.shape_cast %76 : vector<1x8x128xf32> to vector<8x128xf32>
      %78 = vector.shape_cast %75 : vector<8x128xf32> to vector<1x8x128xf32>
      tpu.vector_store %arg4[%c0_42, %c0_43, %c0_44], %78 {strides = array<i32>} : memref<1x8x128xf32, #tpu.memory_space<vmem>>, vector<1x8x128xf32>,
    } else {
    }
    return
  }
  func.func @transform_0(%arg0: i32, %arg1: i32) -> (i32, i32, i32) {
    %c0_i32 = arith.constant 0 : i32
    %c0_i32_0 = arith.constant 0 : i32
    return %arg0, %arg1, %c0_i32 : i32, i32, i32
  }
  func.func @transform_1(%arg0: i32, %arg1: i32) -> (i32, i32, i32) {
    %c0_i32 = arith.constant 0 : i32
    %c0_i32_0 = arith.constant 0 : i32
    return %arg0, %arg1, %c0_i32 : i32, i32, i32
  }
  func.func @transform_2(%arg0: i32, %arg1: i32) -> (i32, i32, i32) {
    %c0_i32 = arith.constant 0 : i32
    %c0_i32_0 = arith.constant 0 : i32
    %c0_i32_1 = arith.constant 0 : i32
    return %arg0, %c0_i32, %c0_i32_0 : i32, i32, i32
  }
}

</mosaic_0001>

<llo_original>
// kernel: tpu_custom_call.1
$region0: #{tpu_custom_call.1}
  #allocation0 [shape = 'u32[]', space=smem, size = 0x4, offset = 0x4, fixed_abs, tag = 'smem constant byte address 0x4 - core index']
  #allocation1 [shape = 'u32[144,128]{1,0:T(1,128)}', space=vmem, size = 0x12000, scoped, tag = 'internal scratch']
  #allocation2 [shape = 'f32[8,128]{1,0:T(8,128)}', space=vmem, size = 0x1000, scoped, tag = 'scratch operand']
  #allocation3 [shape = 'f32[8,128]{1,0:T(8,128)}', space=vmem, size = 0x1000, scoped, tag = 'scratch operand']
  #allocation4 [shape = 'f32[8,128]{1,0:T(8,128)}', space=vmem, size = 0x1000, scoped, tag = 'scratch operand']
  %s0 = inlined_call_operand.hbm [shape: f32[2,8,128], index: 0, kind: input, shape index: {}]
  %s1 = inlined_call_operand.hbm [shape: f32[2,8,128], index: 1, kind: input, shape index: {}]
  %s2 = inlined_call_operand.hbm [shape: f32[2,8,128], index: 2, kind: output, shape index: {}]
  %s3 = sld [smem:[#allocation0]]
  $region57: #{tpu_custom_call.1} parent=0
    _
  %s5 = ssub.s32 1, %s3
  %s6 = scalar_select 0, %s5, %s3
  $region1: #{tpu_custom_call.1} parent=0
    #allocation5 [shape = 'u8[8192]{0}', space=vmem, size = 0x2000, scoped, tag = 'input window, operand 0']
    #allocation6 [shape = 's32[2]{0}', space=sflag, size = 0x8, scoped, tag = 'scoped memory for tpu_custom_call.1']
    #allocation7 [shape = 's32[2]{0}', space=sflag, size = 0x8, scoped, tag = 'scoped memory for tpu_custom_call.1']
    #allocation8 [shape = 'u8[8192]{0}', space=vmem, size = 0x2000, scoped, tag = 'input window, operand 1']
    #allocation9 [shape = 's32[2]{0}', space=sflag, size = 0x8, scoped, tag = 'scoped memory for tpu_custom_call.1']
    #allocation10 [shape = 'u8[8192]{0}', space=vmem, size = 0x2000, scoped, tag = 'output window, operand 0']
    %7 = vsyncpa [#allocation6], 0
    %s8 = scalar_lea.sflag [#allocation6], 1
    %9 = vsyncpa %s8, 0
    %10 = vsyncpa [#allocation9], 0
    %s11 = scalar_lea.sflag [#allocation9], 1
    %12 = vsyncpa %s11, 0
    %13 = vsyncpa [#allocation7], 0
    %s14 = scalar_lea.sflag [#allocation7], 1
    %15 = vsyncpa %s14, 0
    loop: start=0, step=1, limit=4
    $region2: #{tpu_custom_call.1} parent=1 // loop_pre_header
      _
    $region3: #{tpu_custom_call.1} parent=1 // loop_header
      %s17 = sphi 0, %s21
      %p18 = scmp.ge.s32.totalorder %s17, 4
      %s24 = sphi 0, %s36
      %s25 = sphi 0, %s32
      %s26 = sphi 0, %s24
      %s27 = sphi 0, %s25
      %s28 = sphi 0, %s26
      %s29 = sphi 0, %s27
      %s41 = sphi 0, %s43
      %s44 = sphi 0, %s41
      %s45 = sphi 0, %s44
      %s61 = sphi 0, %s45
      %s69 = sphi 0, %s71
      %s72 = sphi 0, %s69
      %s73 = sphi 0, %s72
      %s89 = sphi 0, %s73
      %s95 = sphi 0, %s97
      %s98 = sphi 0, %s95
      %s99 = sphi 0, %s98
      %s115 = sphi 0, %s99
    $region4: #{tpu_custom_call.1} parent=1 // loop_header_branch
      %20 = sbr.rel (%p18) target = $region8
    $region5: #{tpu_custom_call.1} parent=1 // loop_body
      %s22 = ssub.s32 %s17, 1
      %s23 = ssub.s32 %s17, 2
      %s30 = sadd.s32 1, %s25
      %p31 = scmp.ge.s32.totalorder %s30, 1
      %s32 = scalar_select %p31, 0, %s30
      %s33 = sadd.s32 1, %s24
      %s34 = scalar_select %p31, %s33, %s24
      %p35 = scmp.ge.s32.totalorder %s34, 2
      %s36 = scalar_select %p35, 0, %s34
      %s37 = ssub.s32 %s24, %s36
      %s38 = ssub.s32 %s25, %s32
      %s39 = sor.u32 %s37, %s38
      %p40 = scmp.eq.s32.totalorder %s39, 0
      %s42 = sadd.s32 %s41, 1
      %s43 = scalar_select %p40, %s41, %s42
      %p46 = pneg %p40
      %p47 = scmp.eq.s32.totalorder %s17, 1
      %p48 = por %p46, %p47
      %p49 = scmp.ne.s32.totalorder %s41, %s44
      %p50 = scmp.eq.s32.totalorder %s17, 0
      %p51 = por %p49, %p50
      %p52 = scmp.ne.s32.totalorder %s41, %s44
      %p53 = scmp.eq.s32.totalorder %s22, 1
      %p54 = por %p52, %p53
      %p55 = scmp.ne.s32.totalorder %s44, %s45
      %p56 = scmp.eq.s32.totalorder %s22, 0
      %p57 = por %p55, %p56
      %p58 = scmp.ne.s32.totalorder %s44, %s45
      %p59 = scmp.eq.s32.totalorder %s23, 1
      %p60 = por %p58, %p59
      %p62 = scmp.ne.s32.totalorder %s45, %s61
      %p63 = scmp.eq.s32.totalorder %s23, 0
      %p64 = por %p62, %p63
      %s65 = ssub.s32 %s24, %s36
      %s66 = ssub.s32 %s25, %s32
      %s67 = sor.u32 %s65, %s66
      %p68 = scmp.eq.s32.totalorder %s67, 0
      %s70 = sadd.s32 %s69, 1
      %s71 = scalar_select %p68, %s69, %s70
      %p74 = pneg %p68
      %p75 = scmp.eq.s32.totalorder %s17, 1
      %p76 = por %p74, %p75
      %p77 = scmp.ne.s32.totalorder %s69, %s72
      %p78 = scmp.eq.s32.totalorder %s17, 0
      %p79 = por %p77, %p78
      %p80 = scmp.ne.s32.totalorder %s69, %s72
      %p81 = scmp.eq.s32.totalorder %s22, 1
      %p82 = por %p80, %p81
      %p83 = scmp.ne.s32.totalorder %s72, %s73
      %p84 = scmp.eq.s32.totalorder %s22, 0
      %p85 = por %p83, %p84
      %p86 = scmp.ne.s32.totalorder %s72, %s73
      %p87 = scmp.eq.s32.totalorder %s23, 1
      %p88 = por %p86, %p87
      %p90 = scmp.ne.s32.totalorder %s73, %s89
      %p91 = scmp.eq.s32.totalorder %s23, 0
      %p92 = por %p90, %p91
      %s93 = ssub.s32 %s24, %s36
      %p94 = scmp.eq.s32.totalorder %s93, 0
      %s96 = sadd.s32 %s95, 1
      %s97 = scalar_select %p94, %s95, %s96
      %p100 = pneg %p94
      %p101 = scmp.eq.s32.totalorder %s17, 1
      %p102 = por %p100, %p101
      %p103 = scmp.ne.s32.totalorder %s95, %s98
      %p104 = scmp.eq.s32.totalorder %s17, 0
      %p105 = por %p103, %p104
      %p106 = scmp.ne.s32.totalorder %s95, %s98
      %p107 = scmp.eq.s32.totalorder %s22, 1
      %p108 = por %p106, %p107
      %p109 = scmp.ne.s32.totalorder %s98, %s99
      %p110 = scmp.eq.s32.totalorder %s22, 0
      %p111 = por %p109, %p110
      %p112 = scmp.ne.s32.totalorder %s98, %s99
      %p113 = scmp.eq.s32.totalorder %s23, 1
      %p114 = por %p112, %p113
      %p116 = scmp.ne.s32.totalorder %s99, %s115
      %p117 = scmp.eq.s32.totalorder %s23, 0
      %p118 = por %p116, %p117
      %p119 = scmp.le.s32.totalorder 1, %s17
      %p120 = scmp.lt.s32.totalorder %s17, 3
      %p121 = pnand %p119, %p120
      %p122 = pneg %p121
      // Predicated region
      $region9: #{tpu_custom_call.1} parent=5 // pred_check
        _
      $region10: #{tpu_custom_call.1} parent=5 // pred_check_branch
        %124 = sbr.rel (%p121) target = $region12
      $region11: #{tpu_custom_call.1} parent=5 // pred_region
        %s125 = ssub.s32 %s17, 1
      $region12: #{tpu_custom_call.1} parent=5 // pred_fallthru
        _
      %p126 = scmp.lt.s32.totalorder %s17, 2
      // Predicated region
      $region13: #{tpu_custom_call.1} parent=5 // pred_check
        %p127 = pneg %p126
      $region14: #{tpu_custom_call.1} parent=5 // pred_check_branch
        %129 = sbr.rel (%p127) target = $region16
      $region15: #{tpu_custom_call.1} parent=5 // pred_region
        // Predicated region
        $region17: #{tpu_custom_call.1} parent=15 // pred_check
          %p130 = pneg %p51
        $region18: #{tpu_custom_call.1} parent=15 // pred_check_branch
          %132 = sbr.rel (%p130) target = $region20
        $region19: #{tpu_custom_call.1} parent=15 // pred_region
          %s133 = sand.u32 %s41, 1
          %s134 = scalar_lea.sflag [#allocation6], %s133
          %s135 = sand.u32 %s41, 1
          %s136 = smul.addr %s135, 8
          %s137 = scalar_lea.vmem [#allocation5], %s136
          %s139 = ssub.s32 128, 128
          %140 = vsyncadd %s134, %s139
          %s141 = sadd.s32 %s25, %s24
          %s142 = smul.addr %s141, 128
          %s143 = scalar_lea.hbm %s0, %s142
          %s145 = sshll.u32 %s137, 4
          %s146 = int_to_ptr.vmem [resolvable:$true] %s145
          %148 = dma.hbm_to_vmem [thread:$0]  %s143, 128, %s146, %s134
        $region20: #{tpu_custom_call.1} parent=15 // pred_fallthru
          _
        // Predicated region
        $region21: #{tpu_custom_call.1} parent=15 // pred_check
          %p149 = pneg %p79
        $region22: #{tpu_custom_call.1} parent=15 // pred_check_branch
          %151 = sbr.rel (%p149) target = $region24
        $region23: #{tpu_custom_call.1} parent=15 // pred_region
          %s152 = sand.u32 %s69, 1
          %s153 = scalar_lea.sflag [#allocation9], %s152
          %s154 = sand.u32 %s69, 1
          %s155 = smul.addr %s154, 8
          %s156 = scalar_lea.vmem [#allocation8], %s155
          %s158 = ssub.s32 128, 128
          %159 = vsyncadd %s153, %s158
          %s160 = sadd.s32 %s25, %s24
          %s161 = smul.addr %s160, 128
          %s162 = scalar_lea.hbm %s1, %s161
          %s164 = sshll.u32 %s156, 4
          %s165 = int_to_ptr.vmem [resolvable:$true] %s164
          %167 = dma.hbm_to_vmem [thread:$0]  %s162, 128, %s165, %s153
        $region24: #{tpu_custom_call.1} parent=15 // pred_fallthru
          _
      $region16: #{tpu_custom_call.1} parent=5 // pred_fallthru
        _
      %p168 = scmp.le.s32.totalorder 1, %s17
      %p169 = scmp.lt.s32.totalorder %s17, 3
      %p170 = pnand %p168, %p169
      %p171 = pneg %p170
      // Predicated region
      $region25: #{tpu_custom_call.1} parent=5 // pred_check
        _
      $region26: #{tpu_custom_call.1} parent=5 // pred_check_branch
        %173 = sbr.rel (%p170) target = $region28
      $region27: #{tpu_custom_call.1} parent=5 // pred_region
        %s174 = ssub.s32 %s17, 1
        %s175 = sand.u32 %s44, 1
        %s176 = scalar_lea.sflag [#allocation6], %s175
        %s177 = sand.u32 %s44, 1
        %s178 = smul.addr %s177, 8
        %s179 = scalar_lea.vmem [#allocation5], %s178
        // Predicated region
        $region29: #{tpu_custom_call.1} parent=27 // pred_check
          %p180 = pneg %p57
        $region30: #{tpu_custom_call.1} parent=27 // pred_check_branch
          %182 = sbr.rel (%p180) target = $region32
        $region31: #{tpu_custom_call.1} parent=27 // pred_region
          %183 = dma.done %s176, 128
        $region32: #{tpu_custom_call.1} parent=27 // pred_fallthru
          _
        %s184 = sand.u32 %s72, 1
        %s185 = scalar_lea.sflag [#allocation9], %s184
        %s186 = sand.u32 %s72, 1
        %s187 = smul.addr %s186, 8
        %s188 = scalar_lea.vmem [#allocation8], %s187
        // Predicated region
        $region33: #{tpu_custom_call.1} parent=27 // pred_check
          %p189 = pneg %p85
        $region34: #{tpu_custom_call.1} parent=27 // pred_check_branch
          %191 = sbr.rel (%p189) target = $region36
        $region35: #{tpu_custom_call.1} parent=27 // pred_region
          %192 = dma.done %s185, 128
        $region36: #{tpu_custom_call.1} parent=27 // pred_fallthru
          _
        %s193 = sand.u32 %s44, 1
        %s194 = scalar_lea.sflag [#allocation6], %s193
        %s195 = sand.u32 %s44, 1
        %s196 = smul.addr %s195, 8
        %s197 = scalar_lea.vmem [#allocation5], %s196
        %p198 = pneg %p57
        %p199 = pneg %p54
        %s200 = sand.u32 %s72, 1
        %s201 = scalar_lea.sflag [#allocation9], %s200
        %s202 = sand.u32 %s72, 1
        %s203 = smul.addr %s202, 8
        %s204 = scalar_lea.vmem [#allocation8], %s203
        %p205 = pneg %p85
        %p206 = pneg %p82
        %p207 = pneg %p111
        %p208 = pneg %p108
        %s209 = sand.u32 %s98, 1
        %s210 = scalar_lea.sflag [#allocation7], %s209
        %s211 = sand.u32 %s98, 1
        %s212 = smul.addr %s211, 8
        %s213 = scalar_lea.vmem [#allocation10], %s212
        %p214 = scmp.eq.s32.totalorder %s27, 0
        // Predicated region
        $region37: #{tpu_custom_call.1} parent=27 // pred_check
          %p215 = pneg %p214
        $region38: #{tpu_custom_call.1} parent=27 // pred_check_branch
          %217 = sbr.rel (%p215) target = $region40
        $region39: #{tpu_custom_call.1} parent=27 // pred_region
          %218 = vst [vmem:[#allocation2] sm:$0xff] 0.0
          %219 = vst [vmem:[#allocation3] sm:$0xff] 0.0
          %220 = vst [vmem:[#allocation4] sm:$0xff] 0.0
        $region40: #{tpu_custom_call.1} parent=27 // pred_fallthru
          _
        %v221 = vld [vmem:[%s179] sm:$0xff]
        %v222 = vld [vmem:[%s188] sm:$0xff]
        %v223 = vlog2.pop %v221
        %v224 = vmul.f32 %v223, 0.6931472
        %v225 = vmax.f32 %v224, -100.0
        %v226 = vsub.f32 1.0, %v221
        %v227 = vlog2.pop %v226
        %v228 = vmul.f32 %v227, 0.6931472
        %v229 = vmax.f32 %v228, -100.0
        %v230 = vsub.f32 %v225, %v229
        %v231 = vmul.f32 %v222, %v230
        %v232 = vadd.f32 %v231, %v229
        %v233 = vsub.f32 0.0, %v232
        %v234 = vld [vmem:[#allocation2] sm:$0xff]
        %v235 = vadd.f32 %v233, 0.0
        %v236 = vadd.f32 %v234, %v235
        %237 = vst [vmem:[#allocation2] sm:$0xff] %v236
        %v238 = vld [vmem:[#allocation3] sm:$0xff]
        %v239 = vmul.f32 %v221, %v222
        %v240 = vadd.f32 %v239, 0.0
        %v241 = vadd.f32 %v238, %v240
        %242 = vst [vmem:[#allocation3] sm:$0xff] %v241
        %v243 = vld [vmem:[#allocation4] sm:$0xff]
        %v244 = vadd.f32 %v221, %v222
        %v245 = vadd.f32 %v244, 0.0
        %v246 = vadd.f32 %v243, %v245
        %247 = vst [vmem:[#allocation4] sm:$0xff] %v246
        // Predicated region
        $region41: #{tpu_custom_call.1} parent=27 // pred_check
          %p248 = pneg %p214
        $region42: #{tpu_custom_call.1} parent=27 // pred_check_branch
          %250 = sbr.rel (%p248) target = $region44
        $region43: #{tpu_custom_call.1} parent=27 // pred_region
          %v251 = vld [vmem:[#allocation2] sm:$0xff]
          %252 = vadd.xlane.f32.xlu0 %v251
          %v253 = vpop.xlane.xlu0 %252
          %v254 = vrot.slane %v253, 4
          %v255 = vadd.f32 %v253, %v254
          %v256 = vrot.slane %v255, 2
          %v257 = vadd.f32 %v255, %v256
          %v258 = vrot.slane %v257, 1
          %v259 = vadd.f32 %v257, %v258
          %s260 = vtos %v259
          %v261 = vld [vmem:[#allocation3] sm:$0xff]
          %262 = vadd.xlane.f32.xlu0 %v261
          %v263 = vpop.xlane.xlu0 %262
          %v264 = vrot.slane %v263, 4
          %v265 = vadd.f32 %v263, %v264
          %v266 = vrot.slane %v265, 2
          %v267 = vadd.f32 %v265, %v266
          %v268 = vrot.slane %v267, 1
          %v269 = vadd.f32 %v267, %v268
          %s270 = vtos %v269
          %v271 = vld [vmem:[#allocation4] sm:$0xff]
          %272 = vadd.xlane.f32.xlu0 %v271
          %v273 = vpop.xlane.xlu0 %272
          %v274 = vrot.slane %v273, 4
          %v275 = vadd.f32 %v273, %v274
          %v276 = vrot.slane %v275, 2
          %v277 = vadd.f32 %v275, %v276
          %v278 = vrot.slane %v277, 1
          %v279 = vadd.f32 %v277, %v278
          %s280 = vtos %v279
          %s281 = smul.f32 %s270, 2.0
          %s282 = sadd.f32 %s281, 1.0
          %s283 = sadd.f32 %s280, 1.0
          %v284 = vstv %s283
          %v285 = vrcp.pop %v284
          %s286 = vtos %v285
          %s287 = smul.f32 %s282, %s286
          %v288 = vlaneseq
          %v289 = vshrl.u32 %v288, 7
          %v290 = vlaneseq
          %v291 = vand.u32 %v290, 127
          %vm292 = vcmp.eq.s32.totalorder %v289, 0
          %vm293 = vcmp.eq.s32.totalorder %v291, 0
          %vm294 = vmand %vm292, %vm293
          %vm295 = vcmp.eq.s32.totalorder %v291, 1
          %vm296 = vmand %vm292, %vm295
          %v297 = vstv %s287
          %v298 = vsel %vm296, %v297, 0.0
          %v299 = vstv %s260
          %v300 = vsel %vm294, %v299, %v298
          %301 = vst [vmem:[%s213] sm:$0xff] %v300
        $region44: #{tpu_custom_call.1} parent=27 // pred_fallthru
          _
        %s302 = sand.u32 %s98, 1
        %s303 = scalar_lea.sflag [#allocation7], %s302
        %s304 = sand.u32 %s98, 1
        %s305 = smul.addr %s304, 8
        %s306 = scalar_lea.vmem [#allocation10], %s305
        // Predicated region
        $region45: #{tpu_custom_call.1} parent=27 // pred_check
          %p307 = pneg %p108
        $region46: #{tpu_custom_call.1} parent=27 // pred_check_branch
          %309 = sbr.rel (%p307) target = $region48
        $region47: #{tpu_custom_call.1} parent=27 // pred_region
          %s311 = ssub.s32 128, 128
          %312 = vsyncadd %s303, %s311
          %s313 = smul.addr %s26, 128
          %s314 = scalar_lea.hbm %s2, %s313
          %s316 = sshll.u32 %s306, 4
          %s317 = int_to_ptr.vmem [resolvable:$true] %s316
          %319 = dma.vmem_to_hbm [thread:$0]  %s317, 128, %s314, %s303
        $region48: #{tpu_custom_call.1} parent=27 // pred_fallthru
          _
      $region28: #{tpu_custom_call.1} parent=5 // pred_fallthru
        _
      %p320 = scmp.le.s32.totalorder 2, %s17
      // Predicated region
      $region49: #{tpu_custom_call.1} parent=5 // pred_check
        %p321 = pneg %p320
      $region50: #{tpu_custom_call.1} parent=5 // pred_check_branch
        %323 = sbr.rel (%p321) target = $region52
      $region51: #{tpu_custom_call.1} parent=5 // pred_region
        %s324 = ssub.s32 %s17, 2
        // Predicated region
        $region53: #{tpu_custom_call.1} parent=51 // pred_check
          %p325 = pneg %p114
        $region54: #{tpu_custom_call.1} parent=51 // pred_check_branch
          %327 = sbr.rel (%p325) target = $region56
        $region55: #{tpu_custom_call.1} parent=51 // pred_region
          %s328 = sand.u32 %s99, 1
          %s329 = scalar_lea.sflag [#allocation7], %s328
          %s330 = sand.u32 %s99, 1
          %s331 = smul.addr %s330, 8
          %s332 = scalar_lea.vmem [#allocation10], %s331
          %333 = dma.done %s329, 128
        $region56: #{tpu_custom_call.1} parent=51 // pred_fallthru
          _
      $region52: #{tpu_custom_call.1} parent=5 // pred_fallthru
        _
    $region6: #{tpu_custom_call.1} parent=1 // loop_footer
      %s21 = sadd.s32 1, %s17
    $region7: #{tpu_custom_call.1} parent=1 // loop_footer_branch
      %16 = sbr.rel target = $region3
    $region8: #{tpu_custom_call.1} parent=1 // loop_exit
      _
    %334 = vsyncpa [#allocation6], 1
    %s335 = scalar_lea.sflag [#allocation6], 1
    %336 = vsyncpa %s335, 1
    %337 = vsyncpa [#allocation9], 1
    %s338 = scalar_lea.sflag [#allocation9], 1
    %339 = vsyncpa %s338, 1
    %340 = vsyncpa [#allocation7], 1
    %s341 = scalar_lea.sflag [#allocation7], 1
    %342 = vsyncpa %s341, 1

</llo_original>
